<compile_context>
chip_gen: v7x
topology: tpu7x:2x2x1
jax: 0.10.0
libtpu: 0.0.40
codegen_flags: <defaults>
</compile_context>

<pallas_src>
import functools

import jax
import jax.numpy as jnp
import numpy as np
from jax.experimental import pallas as pl
from jax.experimental.pallas import tpu as pltpu


# Tap order t = (ky*3 + kx) with (dy, dx) = (ky-1, kx-1); shared by the weight
# packing, the edge-mask precompute and the in-kernel patch construction.
_TAPS = tuple((dy, dx) for dy in (-1, 0, 1) for dx in (-1, 0, 1))


def _resnet_block_kernel(x_ref, mask_ref, w1_ref, b1_ref, w2_ref, b2_ref,
                         o_ref, *, width):
    """One grid step: `nb` images, each a lane-dense (Cpad, H*W) slab."""
    nb, cp, hw = x_ref.shape
    c_out = o_ref.shape[1]          # real (unpadded) channel count
    mm_dtype = w1_ref.dtype         # bf16 by default, f32 optional

    # Constant, resident operands: load once per grid step (hoisted out of the
    # per-image / per-conv loops).
    edge = [mask_ref[t] for t in range(len(_TAPS))]   # each (1, hw) f32
    w1 = w1_ref[...]                                  # (cp, 9*cp)
    w2 = w2_ref[...]
    b1 = b1_ref[...]                                  # (cp, 1) f32
    b2 = b2_ref[...]

    def conv3x3(x2d, w2d, bias):
        # im2col via lane rolls (XLU, otherwise idle) + precomputed edge
        # masks, then a single (cp, 9*cp) x (9*cp, hw) MXU contraction
        # (one K = 9*Cin matmul instead of nine K = Cin matmuls).
        rows = []
        for t, (dy, dx) in enumerate(_TAPS):
            d = dy * width + dx
            shifted = x2d if d == 0 else pltpu.roll(x2d, (-d) % hw, axis=1)
            rows.append(shifted * edge[t])            # zero out-of-image taps
        patches = jnp.concatenate(rows, axis=0)       # (9*cp, hw) f32, aligned
        y = jnp.dot(w2d, patches.astype(mm_dtype),
                    preferred_element_type=jnp.float32)   # f32 accumulation
        return y + bias                                   # (cp, hw)

    def instance_norm(y, eps=1e-5):
        # Per-channel norm over the lane (spatial) axis; two-pass, f32.
        mean = jnp.mean(y, axis=1, keepdims=True)
        var = jnp.mean(jnp.square(y - mean), axis=1, keepdims=True)
        return (y - mean) * jax.lax.rsqrt(var + eps)

    for b in range(nb):                               # static unroll, nb small
        x2d = x_ref[b].astype(jnp.float32)            # (cp, hw)
        out = conv3x3(x2d, w1, b1)
        out = jnp.maximum(instance_norm(out), 0.0)    # in1 + relu
        out = conv3x3(out, w2, b2)
        out = jnp.maximum(instance_norm(out) + x2d, 0.0)   # in2 + residual + relu
        o_ref[b] = out[:c_out, :].astype(o_ref.dtype)      # drop channel pad


@functools.partial(jax.jit, static_argnames=("matmul_dtype", "block_n"))
def resnet_block(x_nchw, w1, b1, w2, b2, *, matmul_dtype=jnp.bfloat16,
                 block_n=None):
    """x_nchw: (N, C, H, W) f32; w*: (C, C, 3, 3); b*: (C,). Returns NCHW f32."""
    N, C, H, W = x_nchw.shape
    HW = H * W
    Cp = -(-C // 8) * 8             # round channels up to the f32 sublane tile

    # Free (contiguous) reshape -- no HBM transpose of the activations.
    x = x_nchw.reshape(N, C, HW).astype(jnp.float32)
    if Cp != C:
        x = jnp.pad(x, ((0, 0), (0, Cp - C), (0, 0)))

    # 2D weight slab matching the fused im2col matmul:
    #   W2d[co, (ky*3 + kx)*Cp + ci] = w[co, ci, ky, kx], zero on padded rows.
    def pack_w(w):
        wp = jnp.zeros((Cp, 3, 3, Cp), jnp.float32)
        wp = wp.at[:C, :, :, :C].set(jnp.transpose(w, (0, 2, 3, 1)))
        return wp.reshape(Cp, 9 * Cp).astype(matmul_dtype)

    def pack_b(b):
        return jnp.pad(b.astype(jnp.float32), (0, Cp - C)).reshape(Cp, 1)

    w1_k, w2_k = pack_w(w1), pack_w(w2)
    b1_k, b2_k = pack_b(b1), pack_b(b2)

    # Precomputed 3x3 edge-validity masks over the flattened spatial axis
    # (tiny, constant, resident in VMEM; keeps iota/div work out of the body).
    hh = np.arange(HW, dtype=np.int32) // W
    ww = np.arange(HW, dtype=np.int32) % W
    edge_masks = np.stack([
        ((hh + dy >= 0) & (hh + dy < H) & (ww + dx >= 0) & (ww + dx < W))
        for dy, dx in _TAPS
    ]).astype(np.float32).reshape(len(_TAPS), 1, HW)
    edge_masks = jnp.asarray(edge_masks)

    # Batch several images per grid step (amortize per-step overhead) while
    # keeping the double-buffered input block comfortably inside scoped VMEM.
    if block_n is None:
        block_n = N
        while block_n > 1 and (N % block_n or block_n * Cp * HW * 4 > (8 << 20)):
            block_n -= 1
    assert N % block_n == 0, (N, block_n)
    grid = (N // block_n,)

    # Rough per-step VMEM footprint: in/out blocks (double-buffered) + two
    # im2col patch matrices + f32 temporaries; only raise the scoped limit
    # when it is actually needed (smallest default is 16 MiB on v5e).
    step_bytes = 4 * HW * (4 * block_n * Cp + 2 * 9 * Cp + 8 * Cp)
    cparams = dict(dimension_semantics=("parallel",))
    if step_bytes > (16 << 20):
        cparams["vmem_limit_bytes"] = int(min(2 * step_bytes, 100 << 20))
    # NOTE: for very large H*W*C (e.g. v7x's 64 MiB VMEM) add a spatial tile
    # grid axis with a 1-row halo and a two-pass (sum/sumsq) InstanceNorm.

    out = pl.pallas_call(
        functools.partial(_resnet_block_kernel, width=W),
        out_shape=jax.ShapeDtypeStruct((N, C, HW), jnp.float32),
        grid_spec=pltpu.PrefetchScalarGridSpec(
            num_scalar_prefetch=0,
            grid=grid,
            in_specs=[
                pl.BlockSpec((block_n, Cp, HW), lambda n: (n, 0, 0)),
                pl.BlockSpec((len(_TAPS), 1, HW), lambda n: (0, 0, 0)),
                pl.BlockSpec((Cp, 9 * Cp), lambda n: (0, 0)),
                pl.BlockSpec((Cp, 1), lambda n: (0, 0)),
                pl.BlockSpec((Cp, 9 * Cp), lambda n: (0, 0)),
                pl.BlockSpec((Cp, 1), lambda n: (0, 0)),
            ],
            out_specs=pl.BlockSpec((block_n, C, HW), lambda n: (n, 0, 0)),
        ),
        compiler_params=pltpu.CompilerParams(**cparams),
    )(x, edge_masks, w1_k, b1_k, w2_k, b2_k)

    return out.reshape(N, C, H, W)        # free reshape back to NCHW


def _reference(x, w1, b1, w2, b2):
    """Plain-JAX reference matching PyTorch semantics (NCHW)."""
    def conv(x, w, b):
        y = jax.lax.conv_general_dilated(
            x, w, window_strides=(1, 1), padding=((1, 1), (1, 1)),
            dimension_numbers=("NCHW", "OIHW", "NCHW"))
        return y + b.reshape(1, -1, 1, 1)

    def inorm(x, eps=1e-5):
        m = x.mean(axis=(2, 3), keepdims=True)
        v = ((x - m) ** 2).mean(axis=(2, 3), keepdims=True)
        return (x - m) / jnp.sqrt(v + eps)

    out = jax.nn.relu(inorm(conv(x, w1, b1)))
    out = inorm(conv(out, w2, b2))
    return jax.nn.relu(out + x)


def _init_conv_params(key, c_in, c_out, k=3):
    """Deterministic init mimicking PyTorch Conv2d default (uniform +-1/sqrt(fan_in))."""
    fan_in = c_in * k * k
    bound = 1.0 / (fan_in ** 0.5)
    kw, kb = jax.random.split(key)
    w = jax.random.uniform(kw, (c_out, c_in, k, k), jnp.float32, -bound, bound)
    b = jax.random.uniform(kb, (c_out,), jnp.float32, -bound, bound)
    return w, b


if __name__ == "__main__":
    N, C, H, W = 2, 4, 16, 16

    key = jax.random.PRNGKey(0)
    kx, k1, k2 = jax.random.split(key, 3)
    x = jax.random.normal(kx, (N, C, H, W), jnp.float32)
    w1, b1 = _init_conv_params(k1, C, C)
    w2, b2 = _init_conv_params(k2, C, C)

    ref = jax.block_until_ready(_reference(x, w1, b1, w2, b2))

    # Exact-semantics path (f32 MXU operands): tight tolerance.
    out_f32 = jax.block_until_ready(
        resnet_block(x, w1, b1, w2, b2, matmul_dtype=jnp.float32))
    assert out_f32.shape == (N, C, H, W), out_f32.shape
    assert jnp.allclose(out_f32, ref, atol=1e-4, rtol=1e-4), (
        float(jnp.max(jnp.abs(out_f32 - ref))))

    # Default perf path (bf16 MXU operands, f32 accumulation): relaxed
    # tolerance, as anticipated in the review's correctness notes.
    out_bf16 = jax.block_until_ready(resnet_block(x, w1, b1, w2, b2))
    assert out_bf16.shape == (N, C, H, W), out_bf16.shape
    assert jnp.allclose(out_bf16, ref, atol=5e-2, rtol=5e-2), (
        float(jnp.max(jnp.abs(out_bf16 - ref))))

    print("KERNEL_OK")
</pallas_src>

<mosaic_0001>
module attributes {stable_mosaic.version = 11 : i64} {
  func.func @_resnet_block_kernel(%arg0: i32, %arg1: memref<2x8x256xf32, #tpu.memory_space<vmem>>, %arg2: memref<9x1x256xf32, #tpu.memory_space<vmem>>, %arg3: memref<8x72xf32, #tpu.memory_space<vmem>>, %arg4: memref<8x1xf32, #tpu.memory_space<vmem>>, %arg5: memref<8x72xf32, #tpu.memory_space<vmem>>, %arg6: memref<8x1xf32, #tpu.memory_space<vmem>>, %arg7: memref<2x4x256xf32, #tpu.memory_space<vmem>>) attributes {dimension_semantics = [#tpu.dimension_semantics<parallel>], iteration_bounds = array<i64: 1>, scalar_prefetch = 0 : i64, scratch_operands = 0 : i64, tpu.core_type = #tpu.core_type<tc>, window_params = [{transform_indices = @transform_0, window_bounds = array<i64: 2, 8, 256>}, {pipeline_mode = #tpu.pipeline_mode<synchronous>, transform_indices = @transform_1, window_bounds = array<i64: 9, 1, 256>}, {pipeline_mode = #tpu.pipeline_mode<synchronous>, transform_indices = @transform_2, window_bounds = array<i64: 8, 72>}, {pipeline_mode = #tpu.pipeline_mode<synchronous>, transform_indices = @transform_3, window_bounds = array<i64: 8, 1>}, {pipeline_mode = #tpu.pipeline_mode<synchronous>, transform_indices = @transform_4, window_bounds = array<i64: 8, 72>}, {pipeline_mode = #tpu.pipeline_mode<synchronous>, transform_indices = @transform_5, window_bounds = array<i64: 8, 1>}, {transform_indices = @transform_6, window_bounds = array<i64: 2, 4, 256>}]} {
    %c0 = arith.constant 0 : index
    %c0_0 = arith.constant 0 : index
    %c0_1 = arith.constant 0 : index
    %0 = vector.load %arg2[%c0, %c0_0, %c0_1] : memref<9x1x256xf32, #tpu.memory_space<vmem>>, vector<1x1x256xf32>
    %1 = vector.shape_cast %0 : vector<1x1x256xf32> to vector<1x256xf32>
    %c1 = arith.constant 1 : index
    %c0_2 = arith.constant 0 : index
    %c0_3 = arith.constant 0 : index
    %2 = vector.load %arg2[%c1, %c0_2, %c0_3] : memref<9x1x256xf32, #tpu.memory_space<vmem>>, vector<1x1x256xf32>
    %3 = vector.shape_cast %2 : vector<1x1x256xf32> to vector<1x256xf32>
    %c2 = arith.constant 2 : index
    %c0_4 = arith.constant 0 : index
    %c0_5 = arith.constant 0 : index
    %4 = vector.load %arg2[%c2, %c0_4, %c0_5] : memref<9x1x256xf32, #tpu.memory_space<vmem>>, vector<1x1x256xf32>
    %5 = vector.shape_cast %4 : vector<1x1x256xf32> to vector<1x256xf32>
    %c3 = arith.constant 3 : index
    %c0_6 = arith.constant 0 : index
    %c0_7 = arith.constant 0 : index
    %6 = vector.load %arg2[%c3, %c0_6, %c0_7] : memref<9x1x256xf32, #tpu.memory_space<vmem>>, vector<1x1x256xf32>
    %7 = vector.shape_cast %6 : vector<1x1x256xf32> to vector<1x256xf32>
    %c4 = arith.constant 4 : index
    %c0_8 = arith.constant 0 : index
    %c0_9 = arith.constant 0 : index
    %8 = vector.load %arg2[%c4, %c0_8, %c0_9] : memref<9x1x256xf32, #tpu.memory_space<vmem>>, vector<1x1x256xf32>
    %9 = vector.shape_cast %8 : vector<1x1x256xf32> to vector<1x256xf32>
    %c5 = arith.constant 5 : index
    %c0_10 = arith.constant 0 : index
    %c0_11 = arith.constant 0 : index
    %10 = vector.load %arg2[%c5, %c0_10, %c0_11] : memref<9x1x256xf32, #tpu.memory_space<vmem>>, vector<1x1x256xf32>
    %11 = vector.shape_cast %10 : vector<1x1x256xf32> to vector<1x256xf32>
    %c6 = arith.constant 6 : index
    %c0_12 = arith.constant 0 : index
    %c0_13 = arith.constant 0 : index
    %12 = vector.load %arg2[%c6, %c0_12, %c0_13] : memref<9x1x256xf32, #tpu.memory_space<vmem>>, vector<1x1x256xf32>
    %13 = vector.shape_cast %12 : vector<1x1x256xf32> to vector<1x256xf32>
    %c7 = arith.constant 7 : index
    %c0_14 = arith.constant 0 : index
    %c0_15 = arith.constant 0 : index
    %14 = vector.load %arg2[%c7, %c0_14, %c0_15] : memref<9x1x256xf32, #tpu.memory_space<vmem>>, vector<1x1x256xf32>
    %15 = vector.shape_cast %14 : vector<1x1x256xf32> to vector<1x256xf32>
    %c8 = arith.constant 8 : index
    %c0_16 = arith.constant 0 : index
    %c0_17 = arith.constant 0 : index
    %16 = vector.load %arg2[%c8, %c0_16, %c0_17] : memref<9x1x256xf32, #tpu.memory_space<vmem>>, vector<1x1x256xf32>
    %17 = vector.shape_cast %16 : vector<1x1x256xf32> to vector<1x256xf32>
    %c0_18 = arith.constant 0 : index
    %c0_19 = arith.constant 0 : index
    %18 = vector.load %arg3[%c0_18, %c0_19] : memref<8x72xf32, #tpu.memory_space<vmem>>, vector<8x72xf32>
    %c0_20 = arith.constant 0 : index
    %c0_21 = arith.constant 0 : index
    %19 = vector.load %arg5[%c0_20, %c0_21] : memref<8x72xf32, #tpu.memory_space<vmem>>, vector<8x72xf32>
    %c0_22 = arith.constant 0 : index
    %c0_23 = arith.constant 0 : index
    %20 = vector.load %arg4[%c0_22, %c0_23] : memref<8x1xf32, #tpu.memory_space<vmem>>, vector<8x1xf32>
    %c0_24 = arith.constant 0 : index
    %c0_25 = arith.constant 0 : index
    %21 = vector.load %arg6[%c0_24, %c0_25] : memref<8x1xf32, #tpu.memory_space<vmem>>, vector<8x1xf32>
    %c0_26 = arith.constant 0 : index
    %c0_27 = arith.constant 0 : index
    %c0_28 = arith.constant 0 : index
    %22 = vector.load %arg1[%c0_26, %c0_27, %c0_28] : memref<2x8x256xf32, #tpu.memory_space<vmem>>, vector<1x8x256xf32>
    %23 = vector.shape_cast %22 : vector<1x8x256xf32> to vector<8x256xf32>
    %c17_i32 = arith.constant 17 : i32
    %24 = tpu.dynamic_rotate %23 by %c17_i32 dim 1 : vector<8x256xf32>, i32 -> vector<8x256xf32>
    %25 = vector.broadcast %1 : vector<1x256xf32> to vector<8x256xf32>
    %26 = arith.mulf %24, %25 : vector<8x256xf32>
    %c16_i32 = arith.constant 16 : i32
    %27 = tpu.dynamic_rotate %23 by %c16_i32 dim 1 : vector<8x256xf32>, i32 -> vector<8x256xf32>
    %28 = vector.broadcast %3 : vector<1x256xf32> to vector<8x256xf32>
    %29 = arith.mulf %27, %28 : vector<8x256xf32>
    %c15_i32 = arith.constant 15 : i32
    %30 = tpu.dynamic_rotate %23 by %c15_i32 dim 1 : vector<8x256xf32>, i32 -> vector<8x256xf32>
    %31 = vector.broadcast %5 : vector<1x256xf32> to vector<8x256xf32>
    %32 = arith.mulf %30, %31 : vector<8x256xf32>
    %c1_i32 = arith.constant 1 : i32
    %33 = tpu.dynamic_rotate %23 by %c1_i32 dim 1 : vector<8x256xf32>, i32 -> vector<8x256xf32>
    %34 = vector.broadcast %7 : vector<1x256xf32> to vector<8x256xf32>
    %35 = arith.mulf %33, %34 : vector<8x256xf32>
    %36 = vector.broadcast %9 : vector<1x256xf32> to vector<8x256xf32>
    %37 = arith.mulf %23, %36 : vector<8x256xf32>
    %c255_i32 = arith.constant 255 : i32
    %38 = tpu.dynamic_rotate %23 by %c255_i32 dim 1 : vector<8x256xf32>, i32 -> vector<8x256xf32>
    %39 = vector.broadcast %11 : vector<1x256xf32> to vector<8x256xf32>
    %40 = arith.mulf %38, %39 : vector<8x256xf32>
    %c241_i32 = arith.constant 241 : i32
    %41 = tpu.dynamic_rotate %23 by %c241_i32 dim 1 : vector<8x256xf32>, i32 -> vector<8x256xf32>
    %42 = vector.broadcast %13 : vector<1x256xf32> to vector<8x256xf32>
    %43 = arith.mulf %41, %42 : vector<8x256xf32>
    %c240_i32 = arith.constant 240 : i32
    %44 = tpu.dynamic_rotate %23 by %c240_i32 dim 1 : vector<8x256xf32>, i32 -> vector<8x256xf32>
    %45 = vector.broadcast %15 : vector<1x256xf32> to vector<8x256xf32>
    %46 = arith.mulf %44, %45 : vector<8x256xf32>
    %c239_i32 = arith.constant 239 : i32
    %47 = tpu.dynamic_rotate %23 by %c239_i32 dim 1 : vector<8x256xf32>, i32 -> vector<8x256xf32>
    %48 = vector.broadcast %17 : vector<1x256xf32> to vector<8x256xf32>
    %49 = arith.mulf %47, %48 : vector<8x256xf32>
    %50 = tpu.concatenate %26, %29, %32, %35, %37, %40, %43, %46, %49 in 0 : vector<8x256xf32>, vector<8x256xf32>, vector<8x256xf32>, vector<8x256xf32>, vector<8x256xf32>, vector<8x256xf32>, vector<8x256xf32>, vector<8x256xf32>, vector<8x256xf32> -> vector<72x256xf32>
    %cst = arith.constant dense<0.000000e+00> : vector<8x256xf32>
    %51 = tpu.matmul %18, %50, %cst {dimension_numbers = #tpu.dot_dimension_numbers<[1], [0], [0], [1], [0, 0, 1, 1], [], []>} : vector<8x72xf32>, vector<72x256xf32>, vector<8x256xf32> -> vector<8x256xf32>
    %52 = vector.broadcast %20 : vector<8x1xf32> to vector<8x256xf32>
    %53 = arith.addf %51, %52 : vector<8x256xf32>
    %cst_29 = arith.constant dense<0.000000e+00> : vector<8xf32>
    %54 = vector.multi_reduction <add>, %53, %cst_29 [1] : vector<8x256xf32> to vector<8xf32>
    %55 = vector.shape_cast %54 : vector<8xf32> to vector<8x1xf32>
    %cst_30 = arith.constant 2.560000e+02 : f32
    %56 = vector.broadcast %cst_30 : f32 to vector<8x1xf32>
    %57 = arith.divf %55, %56 : vector<8x1xf32>
    %58 = vector.broadcast %57 : vector<8x1xf32> to vector<8x256xf32>
    %59 = arith.subf %53, %58 : vector<8x256xf32>
    %60 = arith.mulf %59, %59 : vector<8x256xf32>
    %cst_31 = arith.constant dense<0.000000e+00> : vector<8xf32>
    %61 = vector.multi_reduction <add>, %60, %cst_31 [1] : vector<8x256xf32> to vector<8xf32>
    %62 = vector.shape_cast %61 : vector<8xf32> to vector<8x1xf32>
    %cst_32 = arith.constant 2.560000e+02 : f32
    %63 = vector.broadcast %cst_32 : f32 to vector<8x1xf32>
    %64 = arith.divf %62, %63 : vector<8x1xf32>
    %65 = vector.broadcast %57 : vector<8x1xf32> to vector<8x256xf32>
    %66 = arith.subf %53, %65 : vector<8x256xf32>
    %cst_33 = arith.constant 9.99999974E-6 : f32
    %67 = vector.broadcast %cst_33 : f32 to vector<8x1xf32>
    %68 = arith.addf %64, %67 : vector<8x1xf32>
    %69 = math.rsqrt %68 : vector<8x1xf32>
    %70 = vector.broadcast %69 : vector<8x1xf32> to vector<8x256xf32>
    %71 = arith.mulf %66, %70 : vector<8x256xf32>
    %cst_34 = arith.constant 0.000000e+00 : f32
    %72 = vector.broadcast %cst_34 : f32 to vector<8x256xf32>
    %73 = arith.maximumf %71, %72 : vector<8x256xf32>
    %c17_i32_35 = arith.constant 17 : i32
    %74 = tpu.dynamic_rotate %73 by %c17_i32_35 dim 1 : vector<8x256xf32>, i32 -> vector<8x256xf32>
    %75 = vector.broadcast %1 : vector<1x256xf32> to vector<8x256xf32>
    %76 = arith.mulf %74, %75 : vector<8x256xf32>
    %c16_i32_36 = arith.constant 16 : i32
    %77 = tpu.dynamic_rotate %73 by %c16_i32_36 dim 1 : vector<8x256xf32>, i32 -> vector<8x256xf32>
    %78 = vector.broadcast %3 : vector<1x256xf32> to vector<8x256xf32>
    %79 = arith.mulf %77, %78 : vector<8x256xf32>
    %c15_i32_37 = arith.constant 15 : i32
    %80 = tpu.dynamic_rotate %73 by %c15_i32_37 dim 1 : vector<8x256xf32>, i32 -> vector<8x256xf32>
    %81 = vector.broadcast %5 : vector<1x256xf32> to vector<8x256xf32>
    %82 = arith.mulf %80, %81 : vector<8x256xf32>
    %c1_i32_38 = arith.constant 1 : i32
    %83 = tpu.dynamic_rotate %73 by %c1_i32_38 dim 1 : vector<8x256xf32>, i32 -> vector<8x256xf32>
    %84 = vector.broadcast %7 : vector<1x256xf32> to vector<8x256xf32>
    %85 = arith.mulf %83, %84 : vector<8x256xf32>
    %86 = vector.broadcast %9 : vector<1x256xf32> to vector<8x256xf32>
    %87 = arith.mulf %73, %86 : vector<8x256xf32>
    %c255_i32_39 = arith.constant 255 : i32
    %88 = tpu.dynamic_rotate %73 by %c255_i32_39 dim 1 : vector<8x256xf32>, i32 -> vector<8x256xf32>
    %89 = vector.broadcast %11 : vector<1x256xf32> to vector<8x256xf32>
    %90 = arith.mulf %88, %89 : vector<8x256xf32>
    %c241_i32_40 = arith.constant 241 : i32
    %91 = tpu.dynamic_rotate %73 by %c241_i32_40 dim 1 : vector<8x256xf32>, i32 -> vector<8x256xf32>
    %92 = vector.broadcast %13 : vector<1x256xf32> to vector<8x256xf32>
    %93 = arith.mulf %91, %92 : vector<8x256xf32>
    %c240_i32_41 = arith.constant 240 : i32
    %94 = tpu.dynamic_rotate %73 by %c240_i32_41 dim 1 : vector<8x256xf32>, i32 -> vector<8x256xf32>
    %95 = vector.broadcast %15 : vector<1x256xf32> to vector<8x256xf32>
    %96 = arith.mulf %94, %95 : vector<8x256xf32>
    %c239_i32_42 = arith.constant 239 : i32
    %97 = tpu.dynamic_rotate %73 by %c239_i32_42 dim 1 : vector<8x256xf32>, i32 -> vector<8x256xf32>
    %98 = vector.broadcast %17 : vector<1x256xf32> to vector<8x256xf32>
    %99 = arith.mulf %97, %98 : vector<8x256xf32>
    %100 = tpu.concatenate %76, %79, %82, %85, %87, %90, %93, %96, %99 in 0 : vector<8x256xf32>, vector<8x256xf32>, vector<8x256xf32>, vector<8x256xf32>, vector<8x256xf32>, vector<8x256xf32>, vector<8x256xf32>, vector<8x256xf32>, vector<8x256xf32> -> vector<72x256xf32>
    %cst_43 = arith.constant dense<0.000000e+00> : vector<8x256xf32>
    %101 = tpu.matmul %19, %100, %cst_43 {dimension_numbers = #tpu.dot_dimension_numbers<[1], [0], [0], [1], [0, 0, 1, 1], [], []>} : vector<8x72xf32>, vector<72x256xf32>, vector<8x256xf32> -> vector<8x256xf32>
    %102 = vector.broadcast %21 : vector<8x1xf32> to vector<8x256xf32>
    %103 = arith.addf %101, %102 : vector<8x256xf32>
    %cst_44 = arith.constant dense<0.000000e+00> : vector<8xf32>
    %104 = vector.multi_reduction <add>, %103, %cst_44 [1] : vector<8x256xf32> to vector<8xf32>
    %105 = vector.shape_cast %104 : vector<8xf32> to vector<8x1xf32>
    %cst_45 = arith.constant 2.560000e+02 : f32
    %106 = vector.broadcast %cst_45 : f32 to vector<8x1xf32>
    %107 = arith.divf %105, %106 : vector<8x1xf32>
    %108 = vector.broadcast %107 : vector<8x1xf32> to vector<8x256xf32>
    %109 = arith.subf %103, %108 : vector<8x256xf32>
    %110 = arith.mulf %109, %109 : vector<8x256xf32>
    %cst_46 = arith.constant dense<0.000000e+00> : vector<8xf32>
    %111 = vector.multi_reduction <add>, %110, %cst_46 [1] : vector<8x256xf32> to vector<8xf32>
    %112 = vector.shape_cast %111 : vector<8xf32> to vector<8x1xf32>
    %cst_47 = arith.constant 2.560000e+02 : f32
    %113 = vector.broadcast %cst_47 : f32 to vector<8x1xf32>
    %114 = arith.divf %112, %113 : vector<8x1xf32>
    %115 = vector.broadcast %107 : vector<8x1xf32> to vector<8x256xf32>
    %116 = arith.subf %103, %115 : vector<8x256xf32>
    %cst_48 = arith.constant 9.99999974E-6 : f32
    %117 = vector.broadcast %cst_48 : f32 to vector<8x1xf32>
    %118 = arith.addf %114, %117 : vector<8x1xf32>
    %119 = math.rsqrt %118 : vector<8x1xf32>
    %120 = vector.broadcast %119 : vector<8x1xf32> to vector<8x256xf32>
    %121 = arith.mulf %116, %120 : vector<8x256xf32>
    %122 = arith.addf %121, %23 : vector<8x256xf32>
    %cst_49 = arith.constant 0.000000e+00 : f32
    %123 = vector.broadcast %cst_49 : f32 to vector<8x256xf32>
    %124 = arith.maximumf %122, %123 : vector<8x256xf32>
    %125 = vector.extract_strided_slice %124 {offsets = [0, 0], sizes = [4, 256], strides = [1, 1]} : vector<8x256xf32> to vector<4x256xf32>
    %c0_50 = arith.constant 0 : index
    %c0_51 = arith.constant 0 : index
    %c0_52 = arith.constant 0 : index
    %126 = vector.load %arg7[%c0_50, %c0_51, %c0_52] : memref<2x4x256xf32, #tpu.memory_space<vmem>>, vector<1x4x256xf32>
    %127 = vector.shape_cast %126 : vector<1x4x256xf32> to vector<4x256xf32>
    %128 = vector.shape_cast %125 : vector<4x256xf32> to vector<1x4x256xf32>
    tpu.vector_store %arg7[%c0_50, %c0_51, %c0_52], %128 {strides = array<i32>} : memref<2x4x256xf32, #tpu.memory_space<vmem>>, vector<1x4x256xf32>,
    %c1_53 = arith.constant 1 : index
    %c0_54 = arith.constant 0 : index
    %c0_55 = arith.constant 0 : index
    %129 = vector.load %arg1[%c1_53, %c0_54, %c0_55] : memref<2x8x256xf32, #tpu.memory_space<vmem>>, vector<1x8x256xf32>
    %130 = vector.shape_cast %129 : vector<1x8x256xf32> to vector<8x256xf32>
    %c17_i32_56 = arith.constant 17 : i32
    %131 = tpu.dynamic_rotate %130 by %c17_i32_56 dim 1 : vector<8x256xf32>, i32 -> vector<8x256xf32>
    %132 = vector.broadcast %1 : vector<1x256xf32> to vector<8x256xf32>
    %133 = arith.mulf %131, %132 : vector<8x256xf32>
    %c16_i32_57 = arith.constant 16 : i32
    %134 = tpu.dynamic_rotate %130 by %c16_i32_57 dim 1 : vector<8x256xf32>, i32 -> vector<8x256xf32>
    %135 = vector.broadcast %3 : vector<1x256xf32> to vector<8x256xf32>
    %136 = arith.mulf %134, %135 : vector<8x256xf32>
    %c15_i32_58 = arith.constant 15 : i32
    %137 = tpu.dynamic_rotate %130 by %c15_i32_58 dim 1 : vector<8x256xf32>, i32 -> vector<8x256xf32>
    %138 = vector.broadcast %5 : vector<1x256xf32> to vector<8x256xf32>
    %139 = arith.mulf %137, %138 : vector<8x256xf32>
    %c1_i32_59 = arith.constant 1 : i32
    %140 = tpu.dynamic_rotate %130 by %c1_i32_59 dim 1 : vector<8x256xf32>, i32 -> vector<8x256xf32>
    %141 = vector.broadcast %7 : vector<1x256xf32> to vector<8x256xf32>
    %142 = arith.mulf %140, %141 : vector<8x256xf32>
    %143 = vector.broadcast %9 : vector<1x256xf32> to vector<8x256xf32>
    %144 = arith.mulf %130, %143 : vector<8x256xf32>
    %c255_i32_60 = arith.constant 255 : i32
    %145 = tpu.dynamic_rotate %130 by %c255_i32_60 dim 1 : vector<8x256xf32>, i32 -> vector<8x256xf32>
    %146 = vector.broadcast %11 : vector<1x256xf32> to vector<8x256xf32>
    %147 = arith.mulf %145, %146 : vector<8x256xf32>
    %c241_i32_61 = arith.constant 241 : i32
    %148 = tpu.dynamic_rotate %130 by %c241_i32_61 dim 1 : vector<8x256xf32>, i32 -> vector<8x256xf32>
    %149 = vector.broadcast %13 : vector<1x256xf32> to vector<8x256xf32>
    %150 = arith.mulf %148, %149 : vector<8x256xf32>
    %c240_i32_62 = arith.constant 240 : i32
    %151 = tpu.dynamic_rotate %130 by %c240_i32_62 dim 1 : vector<8x256xf32>, i32 -> vector<8x256xf32>
    %152 = vector.broadcast %15 : vector<1x256xf32> to vector<8x256xf32>
    %153 = arith.mulf %151, %152 : vector<8x256xf32>
    %c239_i32_63 = arith.constant 239 : i32
    %154 = tpu.dynamic_rotate %130 by %c239_i32_63 dim 1 : vector<8x256xf32>, i32 -> vector<8x256xf32>
    %155 = vector.broadcast %17 : vector<1x256xf32> to vector<8x256xf32>
    %156 = arith.mulf %154, %155 : vector<8x256xf32>
    %157 = tpu.concatenate %133, %136, %139, %142, %144, %147, %150, %153, %156 in 0 : vector<8x256xf32>, vector<8x256xf32>, vector<8x256xf32>, vector<8x256xf32>, vector<8x256xf32>, vector<8x256xf32>, vector<8x256xf32>, vector<8x256xf32>, vector<8x256xf32> -> vector<72x256xf32>
    %cst_64 = arith.constant dense<0.000000e+00> : vector<8x256xf32>
    %158 = tpu.matmul %18, %157, %cst_64 {dimension_numbers = #tpu.dot_dimension_numbers<[1], [0], [0], [1], [0, 0, 1, 1], [], []>} : vector<8x72xf32>, vector<72x256xf32>, vector<8x256xf32> -> vector<8x256xf32>
    %159 = vector.broadcast %20 : vector<8x1xf32> to vector<8x256xf32>
    %160 = arith.addf %158, %159 : vector<8x256xf32>
    %cst_65 = arith.constant dense<0.000000e+00> : vector<8xf32>
    %161 = vector.multi_reduction <add>, %160, %cst_65 [1] : vector<8x256xf32> to vector<8xf32>
    %162 = vector.shape_cast %161 : vector<8xf32> to vector<8x1xf32>
    %cst_66 = arith.constant 2.560000e+02 : f32
    %163 = vector.broadcast %cst_66 : f32 to vector<8x1xf32>
    %164 = arith.divf %162, %163 : vector<8x1xf32>
    %165 = vector.broadcast %164 : vector<8x1xf32> to vector<8x256xf32>
    %166 = arith.subf %160, %165 : vector<8x256xf32>
    %167 = arith.mulf %166, %166 : vector<8x256xf32>
    %cst_67 = arith.constant dense<0.000000e+00> : vector<8xf32>
    %168 = vector.multi_reduction <add>, %167, %cst_67 [1] : vector<8x256xf32> to vector<8xf32>
    %169 = vector.shape_cast %168 : vector<8xf32> to vector<8x1xf32>
    %cst_68 = arith.constant 2.560000e+02 : f32
    %170 = vector.broadcast %cst_68 : f32 to vector<8x1xf32>
    %171 = arith.divf %169, %170 : vector<8x1xf32>
    %172 = vector.broadcast %164 : vector<8x1xf32> to vector<8x256xf32>
    %173 = arith.subf %160, %172 : vector<8x256xf32>
    %cst_69 = arith.constant 9.99999974E-6 : f32
    %174 = vector.broadcast %cst_69 : f32 to vector<8x1xf32>
    %175 = arith.addf %171, %174 : vector<8x1xf32>
    %176 = math.rsqrt %175 : vector<8x1xf32>
    %177 = vector.broadcast %176 : vector<8x1xf32> to vector<8x256xf32>
    %178 = arith.mulf %173, %177 : vector<8x256xf32>
    %cst_70 = arith.constant 0.000000e+00 : f32
    %179 = vector.broadcast %cst_70 : f32 to vector<8x256xf32>
    %180 = arith.maximumf %178, %179 : vector<8x256xf32>
    %c17_i32_71 = arith.constant 17 : i32
    %181 = tpu.dynamic_rotate %180 by %c17_i32_71 dim 1 : vector<8x256xf32>, i32 -> vector<8x256xf32>
    %182 = vector.broadcast %1 : vector<1x256xf32> to vector<8x256xf32>
    %183 = arith.mulf %181, %182 : vector<8x256xf32>
    %c16_i32_72 = arith.constant 16 : i32
    %184 = tpu.dynamic_rotate %180 by %c16_i32_72 dim 1 : vector<8x256xf32>, i32 -> vector<8x256xf32>
    %185 = vector.broadcast %3 : vector<1x256xf32> to vector<8x256xf32>
    %186 = arith.mulf %184, %185 : vector<8x256xf32>
    %c15_i32_73 = arith.constant 15 : i32
    %187 = tpu.dynamic_rotate %180 by %c15_i32_73 dim 1 : vector<8x256xf32>, i32 -> vector<8x256xf32>
    %188 = vector.broadcast %5 : vector<1x256xf32> to vector<8x256xf32>
    %189 = arith.mulf %187, %188 : vector<8x256xf32>
    %c1_i32_74 = arith.constant 1 : i32
    %190 = tpu.dynamic_rotate %180 by %c1_i32_74 dim 1 : vector<8x256xf32>, i32 -> vector<8x256xf32>
    %191 = vector.broadcast %7 : vector<1x256xf32> to vector<8x256xf32>
    %192 = arith.mulf %190, %191 : vector<8x256xf32>
    %193 = vector.broadcast %9 : vector<1x256xf32> to vector<8x256xf32>
    %194 = arith.mulf %180, %193 : vector<8x256xf32>
    %c255_i32_75 = arith.constant 255 : i32
    %195 = tpu.dynamic_rotate %180 by %c255_i32_75 dim 1 : vector<8x256xf32>, i32 -> vector<8x256xf32>
    %196 = vector.broadcast %11 : vector<1x256xf32> to vector<8x256xf32>
    %197 = arith.mulf %195, %196 : vector<8x256xf32>
    %c241_i32_76 = arith.constant 241 : i32
    %198 = tpu.dynamic_rotate %180 by %c241_i32_76 dim 1 : vector<8x256xf32>, i32 -> vector<8x256xf32>
    %199 = vector.broadcast %13 : vector<1x256xf32> to vector<8x256xf32>
    %200 = arith.mulf %198, %199 : vector<8x256xf32>
    %c240_i32_77 = arith.constant 240 : i32
    %201 = tpu.dynamic_rotate %180 by %c240_i32_77 dim 1 : vector<8x256xf32>, i32 -> vector<8x256xf32>
    %202 = vector.broadcast %15 : vector<1x256xf32> to vector<8x256xf32>
    %203 = arith.mulf %201, %202 : vector<8x256xf32>
    %c239_i32_78 = arith.constant 239 : i32
    %204 = tpu.dynamic_rotate %180 by %c239_i32_78 dim 1 : vector<8x256xf32>, i32 -> vector<8x256xf32>
    %205 = vector.broadcast %17 : vector<1x256xf32> to vector<8x256xf32>
    %206 = arith.mulf %204, %205 : vector<8x256xf32>
    %207 = tpu.concatenate %183, %186, %189, %192, %194, %197, %200, %203, %206 in 0 : vector<8x256xf32>, vector<8x256xf32>, vector<8x256xf32>, vector<8x256xf32>, vector<8x256xf32>, vector<8x256xf32>, vector<8x256xf32>, vector<8x256xf32>, vector<8x256xf32> -> vector<72x256xf32>
    %cst_79 = arith.constant dense<0.000000e+00> : vector<8x256xf32>
    %208 = tpu.matmul %19, %207, %cst_79 {dimension_numbers = #tpu.dot_dimension_numbers<[1], [0], [0], [1], [0, 0, 1, 1], [], []>} : vector<8x72xf32>, vector<72x256xf32>, vector<8x256xf32> -> vector<8x256xf32>
    %209 = vector.broadcast %21 : vector<8x1xf32> to vector<8x256xf32>
    %210 = arith.addf %208, %209 : vector<8x256xf32>
    %cst_80 = arith.constant dense<0.000000e+00> : vector<8xf32>
    %211 = vector.multi_reduction <add>, %210, %cst_80 [1] : vector<8x256xf32> to vector<8xf32>
    %212 = vector.shape_cast %211 : vector<8xf32> to vector<8x1xf32>
    %cst_81 = arith.constant 2.560000e+02 : f32
    %213 = vector.broadcast %cst_81 : f32 to vector<8x1xf32>
    %214 = arith.divf %212, %213 : vector<8x1xf32>
    %215 = vector.broadcast %214 : vector<8x1xf32> to vector<8x256xf32>
    %216 = arith.subf %210, %215 : vector<8x256xf32>
    %217 = arith.mulf %216, %216 : vector<8x256xf32>
    %cst_82 = arith.constant dense<0.000000e+00> : vector<8xf32>
    %218 = vector.multi_reduction <add>, %217, %cst_82 [1] : vector<8x256xf32> to vector<8xf32>
    %219 = vector.shape_cast %218 : vector<8xf32> to vector<8x1xf32>
    %cst_83 = arith.constant 2.560000e+02 : f32
    %220 = vector.broadcast %cst_83 : f32 to vector<8x1xf32>
    %221 = arith.divf %219, %220 : vector<8x1xf32>
    %222 = vector.broadcast %214 : vector<8x1xf32> to vector<8x256xf32>
    %223 = arith.subf %210, %222 : vector<8x256xf32>
    %cst_84 = arith.constant 9.99999974E-6 : f32
    %224 = vector.broadcast %cst_84 : f32 to vector<8x1xf32>
    %225 = arith.addf %221, %224 : vector<8x1xf32>
    %226 = math.rsqrt %225 : vector<8x1xf32>
    %227 = vector.broadcast %226 : vector<8x1xf32> to vector<8x256xf32>
    %228 = arith.mulf %223, %227 : vector<8x256xf32>
    %229 = arith.addf %228, %130 : vector<8x256xf32>
    %cst_85 = arith.constant 0.000000e+00 : f32
    %230 = vector.broadcast %cst_85 : f32 to vector<8x256xf32>
    %231 = arith.maximumf %229, %230 : vector<8x256xf32>
    %232 = vector.extract_strided_slice %231 {offsets = [0, 0], sizes = [4, 256], strides = [1, 1]} : vector<8x256xf32> to vector<4x256xf32>
    %c1_86 = arith.constant 1 : index
    %c0_87 = arith.constant 0 : index
    %c0_88 = arith.constant 0 : index
    %233 = vector.load %arg7[%c1_86, %c0_87, %c0_88] : memref<2x4x256xf32, #tpu.memory_space<vmem>>, vector<1x4x256xf32>
    %234 = vector.shape_cast %233 : vector<1x4x256xf32> to vector<4x256xf32>
    %235 = vector.shape_cast %232 : vector<4x256xf32> to vector<1x4x256xf32>
    tpu.vector_store %arg7[%c1_86, %c0_87, %c0_88], %235 {strides = array<i32>} : memref<2x4x256xf32, #tpu.memory_space<vmem>>, vector<1x4x256xf32>,
    return
  }
  func.func @transform_0(%arg0: i32) -> (i32, i32, i32) {
    %c0_i32 = arith.constant 0 : i32
    %c0_i32_0 = arith.constant 0 : i32
    %c0_i32_1 = arith.constant 0 : i32
    return %arg0, %c0_i32, %c0_i32_0 : i32, i32, i32
  }
  func.func @transform_1(%arg0: i32) -> (i32, i32, i32) {
    %c0_i32 = arith.constant 0 : i32
    %c0_i32_0 = arith.constant 0 : i32
    %c0_i32_1 = arith.constant 0 : i32
    %c0_i32_2 = arith.constant 0 : i32
    return %c0_i32, %c0_i32_0, %c0_i32_1 : i32, i32, i32
  }
  func.func @transform_2(%arg0: i32) -> (i32, i32) {
    %c0_i32 = arith.constant 0 : i32
    %c0_i32_0 = arith.constant 0 : i32
    %c0_i32_1 = arith.constant 0 : i32
    return %c0_i32, %c0_i32_0 : i32, i32
  }
  func.func @transform_3(%arg0: i32) -> (i32, i32) {
    %c0_i32 = arith.constant 0 : i32
    %c0_i32_0 = arith.constant 0 : i32
    %c0_i32_1 = arith.constant 0 : i32
    return %c0_i32, %c0_i32_0 : i32, i32
  }
  func.func @transform_4(%arg0: i32) -> (i32, i32) {
    %c0_i32 = arith.constant 0 : i32
    %c0_i32_0 = arith.constant 0 : i32
    %c0_i32_1 = arith.constant 0 : i32
    return %c0_i32, %c0_i32_0 : i32, i32
  }
  func.func @transform_5(%arg0: i32) -> (i32, i32) {
    %c0_i32 = arith.constant 0 : i32
    %c0_i32_0 = arith.constant 0 : i32
    %c0_i32_1 = arith.constant 0 : i32
    return %c0_i32, %c0_i32_0 : i32, i32
  }
  func.func @transform_6(%arg0: i32) -> (i32, i32, i32) {
    %c0_i32 = arith.constant 0 : i32
    %c0_i32_0 = arith.constant 0 : i32
    %c0_i32_1 = arith.constant 0 : i32
    return %arg0, %c0_i32, %c0_i32_0 : i32, i32, i32
  }
}

</mosaic_0001>

<llo_original>
// kernel: resnet_block.1
$region0: #{resnet_block.1}
  #allocation0 [shape = 'u32[]', space=smem, size = 0x4, offset = 0x4, fixed_abs, tag = 'smem constant byte address 0x4 - core index']
  #allocation1 [shape = 'u32[144,128]{1,0:T(1,128)}', space=vmem, size = 0x12000, scoped, tag = 'internal scratch']
  %s0 = inlined_call_operand.vmem [shape: f32[2,8,256], index: 0, kind: input, shape index: {}]
  %s1 = inlined_call_operand.vmem [shape: f32[9,1,256], index: 1, kind: input, shape index: {}]
  %s2 = inlined_call_operand.vmem [shape: f32[8,72], index: 2, kind: input, shape index: {}]
  %s3 = inlined_call_operand.vmem [shape: f32[8,1], index: 3, kind: input, shape index: {}]
  %s4 = inlined_call_operand.vmem [shape: f32[8,72], index: 4, kind: input, shape index: {}]
  %s5 = inlined_call_operand.vmem [shape: f32[8,1], index: 5, kind: input, shape index: {}]
  %s6 = inlined_call_operand.vmem [shape: f32[2,4,256], index: 6, kind: output, shape index: {}]
  %s7 = sld [smem:[#allocation0]]
  $region34: #{resnet_block.1} parent=0
    _
  %s9 = ssub.s32 1, %s7
  %s10 = scalar_select 0, %s9, %s7
  // Predicated region
  $region2: #{resnet_block.1} parent=0 // pred_check
    _
  $region3: #{resnet_block.1} parent=0 // pred_check_branch
    %12 = sbr.rel (0) target = $region5
  $region4: #{resnet_block.1} parent=0 // pred_region
    _
  $region5: #{resnet_block.1} parent=0 // pred_fallthru
    _
  // Predicated region
  $region6: #{resnet_block.1} parent=0 // pred_check
    _
  $region7: #{resnet_block.1} parent=0 // pred_check_branch
    %14 = sbr.rel (0) target = $region9
  $region8: #{resnet_block.1} parent=0 // pred_region
    _
  $region9: #{resnet_block.1} parent=0 // pred_fallthru
    _
  // Predicated region
  $region10: #{resnet_block.1} parent=0 // pred_check
    _
  $region11: #{resnet_block.1} parent=0 // pred_check_branch
    %16 = sbr.rel (0) target = $region13
  $region12: #{resnet_block.1} parent=0 // pred_region
    _
  $region13: #{resnet_block.1} parent=0 // pred_fallthru
    _
  // Predicated region
  $region14: #{resnet_block.1} parent=0 // pred_check
    _
  $region15: #{resnet_block.1} parent=0 // pred_check_branch
    %18 = sbr.rel (0) target = $region17
  $region16: #{resnet_block.1} parent=0 // pred_region
    _
  $region17: #{resnet_block.1} parent=0 // pred_fallthru
    _
  // Predicated region
  $region18: #{resnet_block.1} parent=0 // pred_check
    _
  $region19: #{resnet_block.1} parent=0 // pred_check_branch
    %20 = sbr.rel (0) target = $region21
  $region20: #{resnet_block.1} parent=0 // pred_region
    _
  $region21: #{resnet_block.1} parent=0 // pred_fallthru
    _
  // Predicated region
  $region22: #{resnet_block.1} parent=0 // pred_check
    _
  $region23: #{resnet_block.1} parent=0 // pred_check_branch
    %22 = sbr.rel (0) target = $region25
  $region24: #{resnet_block.1} parent=0 // pred_region
    _
  $region25: #{resnet_block.1} parent=0 // pred_fallthru
    _
  %v23 = vld [vmem:[%s1] sm:$0x3]
  %s24 = scalar_lea.vmem %s1, 2
  %v25 = vld [vmem:[%s24] sm:$0x3]
  %s26 = scalar_lea.vmem %s1, 4
  %v27 = vld [vmem:[%s26] sm:$0x3]
  %s28 = scalar_lea.vmem %s1, 6
  %v29 = vld [vmem:[%s28] sm:$0x3]
  %s30 = scalar_lea.vmem %s1, 8
  %v31 = vld [vmem:[%s30] sm:$0x3]
  %s32 = scalar_lea.vmem %s1, 10
  %v33 = vld [vmem:[%s32] sm:$0x3]
  %s34 = scalar_lea.vmem %s1, 12
  %v35 = vld [vmem:[%s34] sm:$0x3]
  %s36 = scalar_lea.vmem %s1, 14
  %v37 = vld [vmem:[%s36] sm:$0x3]
  %s38 = scalar_lea.vmem %s1, 16
  %v39 = vld [vmem:[%s38] sm:$0x3]
  %v40 = vld [vmem:[%s2] sm:$0xff]
  %v41 = vld [vmem:[%s4] sm:$0xff]
  %v42 = vld [vmem:[%s3] sm:$0xff]
  %v43 = vld [vmem:[%s5] sm:$0xff]
  %v44 = vld [vmem:[%s0] sm:$0xff]
  %v45 = vld [vmem:[%s0 + $0x8] sm:$0xff]
  %46 = vrot.lane.b32.xlu0 %v44, 17
  %v47 = vpop.permute.xlu0 %46
  %48 = vrot.lane.b32.xlu0 %v45, 17
  %v49 = vpop.permute.xlu0 %48
  %v50 = vlaneseq
  %v51 = vand.u32 %v50, 127
  %vm52 = vcmp.lt.s32.totalorder %v51, 17
  %v53 = vsel %vm52, %v47, %v49
  %v54 = vsel %vm52, %v49, %v47
  %v56 = vlaneseq
  %v57 = vshrl.u32 %v56, 7
  %v58 = vsub.s32 0, %v57
  %v59 = vrot.slane %v23, %v58
  %v60 = vlaneseq
  %v61 = vshrl.u32 %v60, 7
  %v62 = vsub.s32 1, %v61
  %v63 = vrot.slane %v23, %v62
  %v66 = vmul.f32 %v54, %v59
  %v67 = vmul.f32 %v53, %v63
  %68 = vrot.lane.b32.xlu0 %v44, 16
  %v69 = vpop.permute.xlu0 %68
  %70 = vrot.lane.b32.xlu0 %v45, 16
  %v71 = vpop.permute.xlu0 %70
  %vm72 = vcmp.lt.s32.totalorder %v51, 16
  %v73 = vsel %vm72, %v69, %v71
  %v74 = vsel %vm72, %v71, %v69
  %v76 = vlaneseq
  %v77 = vshrl.u32 %v76, 7
  %v78 = vsub.s32 0, %v77
  %v79 = vrot.slane %v25, %v78
  %v80 = vlaneseq
  %v81 = vshrl.u32 %v80, 7
  %v82 = vsub.s32 1, %v81
  %v83 = vrot.slane %v25, %v82
  %v86 = vmul.f32 %v74, %v79
  %v87 = vmul.f32 %v73, %v83
  %88 = vrot.lane.b32.xlu0 %v44, 15
  %v89 = vpop.permute.xlu0 %88
  %90 = vrot.lane.b32.xlu0 %v45, 15
  %v91 = vpop.permute.xlu0 %90
  %vm92 = vcmp.lt.s32.totalorder %v51, 15
  %v93 = vsel %vm92, %v89, %v91
  %v94 = vsel %vm92, %v91, %v89
  %v96 = vlaneseq
  %v97 = vshrl.u32 %v96, 7
  %v98 = vsub.s32 0, %v97
  %v99 = vrot.slane %v27, %v98
  %v100 = vlaneseq
  %v101 = vshrl.u32 %v100, 7
  %v102 = vsub.s32 1, %v101
  %v103 = vrot.slane %v27, %v102
  %v106 = vmul.f32 %v94, %v99
  %v107 = vmul.f32 %v93, %v103
  %108 = vrot.lane.b32.xlu0 %v44, 1
  %v109 = vpop.permute.xlu0 %108
  %110 = vrot.lane.b32.xlu0 %v45, 1
  %v111 = vpop.permute.xlu0 %110
  %vm112 = vcmp.lt.s32.totalorder %v51, 1
  %v113 = vsel %vm112, %v109, %v111
  %v114 = vsel %vm112, %v111, %v109
  %v116 = vlaneseq
  %v117 = vshrl.u32 %v116, 7
  %v118 = vsub.s32 0, %v117
  %v119 = vrot.slane %v29, %v118
  %v120 = vlaneseq
  %v121 = vshrl.u32 %v120, 7
  %v122 = vsub.s32 1, %v121
  %v123 = vrot.slane %v29, %v122
  %v126 = vmul.f32 %v114, %v119
  %v127 = vmul.f32 %v113, %v123
  %v129 = vlaneseq
  %v130 = vshrl.u32 %v129, 7
  %v131 = vsub.s32 0, %v130
  %v132 = vrot.slane %v31, %v131
  %v133 = vlaneseq
  %v134 = vshrl.u32 %v133, 7
  %v135 = vsub.s32 1, %v134
  %v136 = vrot.slane %v31, %v135
  %v139 = vmul.f32 %v44, %v132
  %v140 = vmul.f32 %v45, %v136
  %141 = vrot.lane.b32.xlu0 %v44, 127
  %v142 = vpop.permute.xlu0 %141
  %143 = vrot.lane.b32.xlu0 %v45, 127
  %v144 = vpop.permute.xlu0 %143
  %vm145 = vcmp.lt.s32.totalorder %v51, 127
  %v146 = vsel %vm145, %v142, %v144
  %v147 = vsel %vm145, %v144, %v142
  %v149 = vlaneseq
  %v150 = vshrl.u32 %v149, 7
  %v151 = vsub.s32 0, %v150
  %v152 = vrot.slane %v33, %v151
  %v153 = vlaneseq
  %v154 = vshrl.u32 %v153, 7
  %v155 = vsub.s32 1, %v154
  %v156 = vrot.slane %v33, %v155
  %v159 = vmul.f32 %v146, %v152
  %v160 = vmul.f32 %v147, %v156
  %161 = vrot.lane.b32.xlu0 %v44, 113
  %v162 = vpop.permute.xlu0 %161
  %163 = vrot.lane.b32.xlu0 %v45, 113
  %v164 = vpop.permute.xlu0 %163
  %vm165 = vcmp.lt.s32.totalorder %v51, 113
  %v166 = vsel %vm165, %v162, %v164
  %v167 = vsel %vm165, %v164, %v162
  %v169 = vlaneseq
  %v170 = vshrl.u32 %v169, 7
  %v171 = vsub.s32 0, %v170
  %v172 = vrot.slane %v35, %v171
  %v173 = vlaneseq
  %v174 = vshrl.u32 %v173, 7
  %v175 = vsub.s32 1, %v174
  %v176 = vrot.slane %v35, %v175
  %v179 = vmul.f32 %v166, %v172
  %v180 = vmul.f32 %v167, %v176
  %181 = vrot.lane.b32.xlu0 %v44, 112
  %v182 = vpop.permute.xlu0 %181
  %183 = vrot.lane.b32.xlu0 %v45, 112
  %v184 = vpop.permute.xlu0 %183
  %vm185 = vcmp.lt.s32.totalorder %v51, 112
  %v186 = vsel %vm185, %v182, %v184
  %v187 = vsel %vm185, %v184, %v182
  %v189 = vlaneseq
  %v190 = vshrl.u32 %v189, 7
  %v191 = vsub.s32 0, %v190
  %v192 = vrot.slane %v37, %v191
  %v193 = vlaneseq
  %v194 = vshrl.u32 %v193, 7
  %v195 = vsub.s32 1, %v194
  %v196 = vrot.slane %v37, %v195
  %v199 = vmul.f32 %v186, %v192
  %v200 = vmul.f32 %v187, %v196
  %201 = vrot.lane.b32.xlu0 %v44, 111
  %v202 = vpop.permute.xlu0 %201
  %203 = vrot.lane.b32.xlu0 %v45, 111
  %v204 = vpop.permute.xlu0 %203
  %vm205 = vcmp.lt.s32.totalorder %v51, 111
  %v206 = vsel %vm205, %v202, %v204
  %v207 = vsel %vm205, %v204, %v202
  %v209 = vlaneseq
  %v210 = vshrl.u32 %v209, 7
  %v211 = vsub.s32 0, %v210
  %v212 = vrot.slane %v39, %v211
  %v213 = vlaneseq
  %v214 = vshrl.u32 %v213, 7
  %v215 = vsub.s32 1, %v214
  %v216 = vrot.slane %v39, %v215
  %v219 = vmul.f32 %v206, %v212
  %v220 = vmul.f32 %v207, %v216
  %222 = vset.pattern.permute.xlu0 0
  %223 = vperm.xlu0 %222, %v42
  %v224 = vpop.permute.xlu0 %223
  %vm226 = vcmask 588800
  %v228 = vsel %vm226, %v40, 0
  %230 = vmatprep.subr.mxu0 %v67
  %231 = vmatpush1.msra.mxu0 %v66
  %232 = vmatprep.subr.mxu0 %v87
  %233 = vmatpush1.msra.mxu0 %v86
  %234 = vmatprep.subr.mxu0 %v107
  %235 = vmatpush1.msra.mxu0 %v106
  %236 = vmatprep.subr.mxu0 %v127
  %237 = vmatpush1.msra.mxu0 %v126
  %238 = vmatprep.subr.mxu0 %v140
  %239 = vmatpush1.msra.mxu0 %v139
  %240 = vmatprep.subr.mxu0 %v160
  %241 = vmatpush1.msra.mxu0 %v159
  %242 = vmatprep.subr.mxu0 %v180
  %243 = vmatpush1.msra.mxu0 %v179
  %244 = vmatprep.subr.mxu0 %v200
  %245 = vmatpush1.msra.mxu0 %v199
  %246 = vmatprep.subr.mxu0 %v220
  %247 = vmatpush1.msra.mxu0 %v219
  %248 = vmatprep.subr.mxu0 0.0
  %249 = vmatpush1.msra.mxu0 0.0
  %250 = vmatprep.subr.mxu0 0.0
  %251 = vmatpush1.msra.mxu0 0.0
  %252 = vmatprep.subr.mxu0 0.0
  %253 = vmatpush1.msra.mxu0 0.0
  %254 = vmatprep.subr.mxu0 0.0
  %255 = vmatpush1.msra.mxu0 0.0
  %256 = vmatprep.subr.mxu0 0.0
  %257 = vmatpush1.msra.mxu0 0.0
  %258 = vmatprep.subr.mxu0 0.0
  %259 = vmatpush1.msra.mxu0 0.0
  %260 = vmatprep.subr.mxu0 0.0
  %261 = vmatpush1.msra.mxu0 0.0
  %262 = vmatprep.subr.mxu0 0.0
  %263 = vmatpush1.msra.mxu0 0.0
  %264 = vmatprep.subr.mxu0 0.0
  %265 = vmatpush1.msra.mxu0 0.0
  %266 = vmatprep.subr.mxu0 0.0
  %267 = vmatpush1.msra.mxu0 0.0
  %268 = vmatprep.subr.mxu0 0.0
  %269 = vmatpush1.msra.mxu0 0.0
  %270 = vmatprep.subr.mxu0 0.0
  %271 = vmatpush1.msra.mxu0 0.0
  %272 = vmatprep.subr.mxu0 0.0
  %273 = vmatpush1.msra.mxu0 0.0
  %274 = vmatprep.subr.mxu0 0.0
  %275 = vmatpush1.msra.mxu0 0.0
  %276 = vmatprep.subr.mxu0 0.0
  %277 = vmatpush1.msra.mxu0 0.0
  %278 = vmatprep.subr.mxu0 0.0
  %279 = vmatpush1.msra.mxu0 0.0
  %280 = vmatprep.subr.mxu0 0.0
  %281 = vmatpush1.msra.mxu0 0.0
  %282 = vmatprep.subr.mxu0 0.0
  %283 = vmatpush1.msra.mxu0 0.0
  %284 = vmatprep.subr.mxu0 0.0
  %285 = vmatpush1.msra.mxu0 0.0
  %286 = vmatprep.subr.mxu0 0.0
  %287 = vmatpush1.msra.mxu0 0.0
  %288 = vmatprep.subr.mxu0 0.0
  %289 = vmatpush1.msra.mxu0 0.0
  %290 = vmatprep.subr.mxu0 0.0
  %291 = vmatpush1.msra.mxu0 0.0
  %292 = vmatprep.subr.mxu0 0.0
  %293 = vmatpush1.msra.mxu0 0.0
  %294 = vmatprep.mubr.f32.mxu0 0.0
  %295 = vmatmul.mubr.f32.gmra.mrb[0].mxu0 %v228
  %v296 = vpop.f32.mrb[0].mxu0
  %v297 = vadd.f32 %v224, %v296
  %v298 = vpop.f32.mrb[0].mxu0
  %v299 = vadd.f32 %v224, %v298
  %300 = vdwg.mxu0
  %v301 = vadd.f32 %v297, %v299
  %302 = vadd.xlane.f32.xlu0 %v301
  %v303 = vpop.xlane.xlu0 %302
  %v304 = vrcp.pop 256.0
  %v305 = vmul.f32 %v303, %v304
  %v306 = vsub.f32 %v297, %v305
  %v307 = vsub.f32 %v299, %v305
  %v308 = vmul.f32 %v306, %v306
  %v309 = vmul.f32 %v307, %v307
  %v310 = vadd.f32 %v308, %v309
  %311 = vadd.xlane.f32.xlu0 %v310
  %v312 = vpop.xlane.xlu0 %311
  %v313 = vmul.f32 %v312, %v304
  %v314 = vadd.f32 %v313, 1e-05
  %v315 = vrsqrt.pop %v314
  %v316 = vmul.f32 %v306, %v315
  %v317 = vmul.f32 %v307, %v315
  %v318 = vmax.f32 %v316, 0.0
  %v319 = vmax.f32 %v317, 0.0
  %320 = vrot.lane.b32.xlu0 %v318, 17
  %v321 = vpop.permute.xlu0 %320
  %322 = vrot.lane.b32.xlu0 %v319, 17
  %v323 = vpop.permute.xlu0 %322
  %v324 = vsel %vm52, %v321, %v323
  %v325 = vsel %vm52, %v323, %v321
  %v326 = vmul.f32 %v325, %v59
  %v327 = vmul.f32 %v324, %v63
  %328 = vrot.lane.b32.xlu0 %v318, 16
  %v329 = vpop.permute.xlu0 %328
  %330 = vrot.lane.b32.xlu0 %v319, 16
  %v331 = vpop.permute.xlu0 %330
  %v332 = vsel %vm72, %v329, %v331
  %v333 = vsel %vm72, %v331, %v329
  %v334 = vmul.f32 %v333, %v79
  %v335 = vmul.f32 %v332, %v83
  %336 = vrot.lane.b32.xlu0 %v318, 15
  %v337 = vpop.permute.xlu0 %336
  %338 = vrot.lane.b32.xlu0 %v319, 15
  %v339 = vpop.permute.xlu0 %338
  %v340 = vsel %vm92, %v337, %v339
  %v341 = vsel %vm92, %v339, %v337
  %v342 = vmul.f32 %v341, %v99
  %v343 = vmul.f32 %v340, %v103
  %344 = vrot.lane.b32.xlu0 %v318, 1
  %v345 = vpop.permute.xlu0 %344
  %346 = vrot.lane.b32.xlu0 %v319, 1
  %v347 = vpop.permute.xlu0 %346
  %v348 = vsel %vm112, %v345, %v347
  %v349 = vsel %vm112, %v347, %v345
  %v350 = vmul.f32 %v349, %v119
  %v351 = vmul.f32 %v348, %v123
  %v352 = vmul.f32 %v318, %v132
  %v353 = vmul.f32 %v319, %v136
  %354 = vrot.lane.b32.xlu0 %v318, 127
  %v355 = vpop.permute.xlu0 %354
  %356 = vrot.lane.b32.xlu0 %v319, 127
  %v357 = vpop.permute.xlu0 %356
  %v358 = vsel %vm145, %v355, %v357
  %v359 = vsel %vm145, %v357, %v355
  %v360 = vmul.f32 %v358, %v152
  %v361 = vmul.f32 %v359, %v156
  %362 = vrot.lane.b32.xlu0 %v318, 113
  %v363 = vpop.permute.xlu0 %362
  %364 = vrot.lane.b32.xlu0 %v319, 113
  %v365 = vpop.permute.xlu0 %364
  %v366 = vsel %vm165, %v363, %v365
  %v367 = vsel %vm165, %v365, %v363
  %v368 = vmul.f32 %v366, %v172
  %v369 = vmul.f32 %v367, %v176
  %370 = vrot.lane.b32.xlu0 %v318, 112
  %v371 = vpop.permute.xlu0 %370
  %372 = vrot.lane.b32.xlu0 %v319, 112
  %v373 = vpop.permute.xlu0 %372
  %v374 = vsel %vm185, %v371, %v373
  %v375 = vsel %vm185, %v373, %v371
  %v376 = vmul.f32 %v374, %v192
  %v377 = vmul.f32 %v375, %v196
  %378 = vrot.lane.b32.xlu0 %v318, 111
  %v379 = vpop.permute.xlu0 %378
  %380 = vrot.lane.b32.xlu0 %v319, 111
  %v381 = vpop.permute.xlu0 %380
  %v382 = vsel %vm205, %v379, %v381
  %v383 = vsel %vm205, %v381, %v379
  %v384 = vmul.f32 %v382, %v212
  %v385 = vmul.f32 %v383, %v216
  %387 = vset.pattern.permute.xlu0 0
  %388 = vperm.xlu0 %387, %v43
  %v389 = vpop.permute.xlu0 %388
  %v392 = vsel %vm226, %v41, 0
  %394 = vmatprep.subr.mxu0 %v327
  %395 = vmatpush1.msra.mxu0 %v326
  %396 = vmatprep.subr.mxu0 %v335
  %397 = vmatpush1.msra.mxu0 %v334
  %398 = vmatprep.subr.mxu0 %v343
  %399 = vmatpush1.msra.mxu0 %v342
  %400 = vmatprep.subr.mxu0 %v351
  %401 = vmatpush1.msra.mxu0 %v350
  %402 = vmatprep.subr.mxu0 %v353
  %403 = vmatpush1.msra.mxu0 %v352
  %404 = vmatprep.subr.mxu0 %v361
  %405 = vmatpush1.msra.mxu0 %v360
  %406 = vmatprep.subr.mxu0 %v369
  %407 = vmatpush1.msra.mxu0 %v368
  %408 = vmatprep.subr.mxu0 %v377
  %409 = vmatpush1.msra.mxu0 %v376
  %410 = vmatprep.subr.mxu0 %v385
  %411 = vmatpush1.msra.mxu0 %v384
  %412 = vmatprep.subr.mxu0 0.0
  %413 = vmatpush1.msra.mxu0 0.0
  %414 = vmatprep.subr.mxu0 0.0
  %415 = vmatpush1.msra.mxu0 0.0
  %416 = vmatprep.subr.mxu0 0.0
  %417 = vmatpush1.msra.mxu0 0.0
  %418 = vmatprep.subr.mxu0 0.0
  %419 = vmatpush1.msra.mxu0 0.0
  %420 = vmatprep.subr.mxu0 0.0
  %421 = vmatpush1.msra.mxu0 0.0
  %422 = vmatprep.subr.mxu0 0.0
  %423 = vmatpush1.msra.mxu0 0.0
  %424 = vmatprep.subr.mxu0 0.0
  %425 = vmatpush1.msra.mxu0 0.0
  %426 = vmatprep.subr.mxu0 0.0
  %427 = vmatpush1.msra.mxu0 0.0
  %428 = vmatprep.subr.mxu0 0.0
  %429 = vmatpush1.msra.mxu0 0.0
  %430 = vmatprep.subr.mxu0 0.0
  %431 = vmatpush1.msra.mxu0 0.0
  %432 = vmatprep.subr.mxu0 0.0
  %433 = vmatpush1.msra.mxu0 0.0
  %434 = vmatprep.subr.mxu0 0.0
  %435 = vmatpush1.msra.mxu0 0.0
  %436 = vmatprep.subr.mxu0 0.0
  %437 = vmatpush1.msra.mxu0 0.0
  %438 = vmatprep.subr.mxu0 0.0
  %439 = vmatpush1.msra.mxu0 0.0
  %440 = vmatprep.subr.mxu0 0.0
  %441 = vmatpush1.msra.mxu0 0.0
  %442 = vmatprep.subr.mxu0 0.0
  %443 = vmatpush1.msra.mxu0 0.0
  %444 = vmatprep.subr.mxu0 0.0
  %445 = vmatpush1.msra.mxu0 0.0
  %446 = vmatprep.subr.mxu0 0.0
  %447 = vmatpush1.msra.mxu0 0.0
  %448 = vmatprep.subr.mxu0 0.0
  %449 = vmatpush1.msra.mxu0 0.0
  %450 = vmatprep.subr.mxu0 0.0
  %451 = vmatpush1.msra.mxu0 0.0
  %452 = vmatprep.subr.mxu0 0.0
  %453 = vmatpush1.msra.mxu0 0.0
  %454 = vmatprep.subr.mxu0 0.0
  %455 = vmatpush1.msra.mxu0 0.0
  %456 = vmatprep.subr.mxu0 0.0
  %457 = vmatpush1.msra.mxu0 0.0
  %458 = vmatprep.mubr.f32.mxu0 0.0
  %459 = vmatmul.mubr.f32.gmra.mrb[0].mxu0 %v392
  %v460 = vpop.f32.mrb[0].mxu0
  %v461 = vadd.f32 %v389, %v460
  %v462 = vpop.f32.mrb[0].mxu0
  %v463 = vadd.f32 %v389, %v462
  %464 = vdwg.mxu0
  %v465 = vadd.f32 %v461, %v463
  %466 = vadd.xlane.f32.xlu0 %v465
  %v467 = vpop.xlane.xlu0 %466
  %v468 = vmul.f32 %v467, %v304
  %v469 = vsub.f32 %v461, %v468
  %v470 = vsub.f32 %v463, %v468
  %v471 = vmul.f32 %v469, %v469
  %v472 = vmul.f32 %v470, %v470
  %v473 = vadd.f32 %v471, %v472
  %474 = vadd.xlane.f32.xlu0 %v473
  %v475 = vpop.xlane.xlu0 %474
  %v476 = vmul.f32 %v475, %v304
  %v477 = vadd.f32 %v476, 1e-05
  %v478 = vrsqrt.pop %v477
  %v479 = vmul.f32 %v469, %v478
  %v480 = vmul.f32 %v470, %v478
  %v481 = vadd.f32 %v479, %v44
  %v482 = vadd.f32 %v480, %v45
  %v483 = vmax.f32 %v481, 0.0
  %v484 = vmax.f32 %v482, 0.0
  %v487 = vcombine.low %v483, %v484
  %489 = vst [vmem:[%s6] sm:$0xff] %v487
  %s490 = scalar_lea.vmem %s0, 16
  %v491 = vld [vmem:[%s490] sm:$0xff]
  %v492 = vld [vmem:[%s490 + $0x8] sm:$0xff]
  %493 = vrot.lane.b32.xlu0 %v491, 17
  %v494 = vpop.permute.xlu0 %493
  %495 = vrot.lane.b32.xlu0 %v492, 17
  %v496 = vpop.permute.xlu0 %495
  %v497 = vsel %vm52, %v494, %v496
  %v498 = vsel %vm52, %v496, %v494
  %v499 = vmul.f32 %v498, %v59
  %v500 = vmul.f32 %v497, %v63
  %501 = vrot.lane.b32.xlu0 %v491, 16
  %v502 = vpop.permute.xlu0 %501
  %503 = vrot.lane.b32.xlu0 %v492, 16
  %v504 = vpop.permute.xlu0 %503
  %v505 = vsel %vm72, %v502, %v504
  %v506 = vsel %vm72, %v504, %v502
  %v507 = vmul.f32 %v506, %v79
  %v508 = vmul.f32 %v505, %v83
  %509 = vrot.lane.b32.xlu0 %v491, 15
  %v510 = vpop.permute.xlu0 %509
  %511 = vrot.lane.b32.xlu0 %v492, 15
  %v512 = vpop.permute.xlu0 %511
  %v513 = vsel %vm92, %v510, %v512
  %v514 = vsel %vm92, %v512, %v510
  %v515 = vmul.f32 %v514, %v99
  %v516 = vmul.f32 %v513, %v103
  %517 = vrot.lane.b32.xlu0 %v491, 1
  %v518 = vpop.permute.xlu0 %517
  %519 = vrot.lane.b32.xlu0 %v492, 1
  %v520 = vpop.permute.xlu0 %519
  %v521 = vsel %vm112, %v518, %v520
  %v522 = vsel %vm112, %v520, %v518
  %v523 = vmul.f32 %v522, %v119
  %v524 = vmul.f32 %v521, %v123
  %v525 = vmul.f32 %v491, %v132
  %v526 = vmul.f32 %v492, %v136
  %527 = vrot.lane.b32.xlu0 %v491, 127
  %v528 = vpop.permute.xlu0 %527
  %529 = vrot.lane.b32.xlu0 %v492, 127
  %v530 = vpop.permute.xlu0 %529
  %v531 = vsel %vm145, %v528, %v530
  %v532 = vsel %vm145, %v530, %v528
  %v533 = vmul.f32 %v531, %v152
  %v534 = vmul.f32 %v532, %v156
  %535 = vrot.lane.b32.xlu0 %v491, 113
  %v536 = vpop.permute.xlu0 %535
  %537 = vrot.lane.b32.xlu0 %v492, 113
  %v538 = vpop.permute.xlu0 %537
  %v539 = vsel %vm165, %v536, %v538
  %v540 = vsel %vm165, %v538, %v536
  %v541 = vmul.f32 %v539, %v172
  %v542 = vmul.f32 %v540, %v176
  %543 = vrot.lane.b32.xlu0 %v491, 112
  %v544 = vpop.permute.xlu0 %543
  %545 = vrot.lane.b32.xlu0 %v492, 112
  %v546 = vpop.permute.xlu0 %545
  %v547 = vsel %vm185, %v544, %v546
  %v548 = vsel %vm185, %v546, %v544
  %v549 = vmul.f32 %v547, %v192
  %v550 = vmul.f32 %v548, %v196
  %551 = vrot.lane.b32.xlu0 %v491, 111
  %v552 = vpop.permute.xlu0 %551
  %553 = vrot.lane.b32.xlu0 %v492, 111
  %v554 = vpop.permute.xlu0 %553
  %v555 = vsel %vm205, %v552, %v554
  %v556 = vsel %vm205, %v554, %v552
  %v557 = vmul.f32 %v555, %v212
  %v558 = vmul.f32 %v556, %v216
  %559 = vmatprep.subr.mxu0 %v500
  %560 = vmatpush1.msra.mxu0 %v499
  %561 = vmatprep.subr.mxu0 %v508
  %562 = vmatpush1.msra.mxu0 %v507
  %563 = vmatprep.subr.mxu0 %v516
  %564 = vmatpush1.msra.mxu0 %v515
  %565 = vmatprep.subr.mxu0 %v524
  %566 = vmatpush1.msra.mxu0 %v523
  %567 = vmatprep.subr.mxu0 %v526
  %568 = vmatpush1.msra.mxu0 %v525
  %569 = vmatprep.subr.mxu0 %v534
  %570 = vmatpush1.msra.mxu0 %v533
  %571 = vmatprep.subr.mxu0 %v542
  %572 = vmatpush1.msra.mxu0 %v541
  %573 = vmatprep.subr.mxu0 %v550
  %574 = vmatpush1.msra.mxu0 %v549
  %575 = vmatprep.subr.mxu0 %v558
  %576 = vmatpush1.msra.mxu0 %v557
  %577 = vmatprep.subr.mxu0 0.0
  %578 = vmatpush1.msra.mxu0 0.0
  %579 = vmatprep.subr.mxu0 0.0
  %580 = vmatpush1.msra.mxu0 0.0
  %581 = vmatprep.subr.mxu0 0.0
  %582 = vmatpush1.msra.mxu0 0.0
  %583 = vmatprep.subr.mxu0 0.0
  %584 = vmatpush1.msra.mxu0 0.0
  %585 = vmatprep.subr.mxu0 0.0
  %586 = vmatpush1.msra.mxu0 0.0
  %587 = vmatprep.subr.mxu0 0.0
  %588 = vmatpush1.msra.mxu0 0.0
  %589 = vmatprep.subr.mxu0 0.0
  %590 = vmatpush1.msra.mxu0 0.0
  %591 = vmatprep.subr.mxu0 0.0
  %592 = vmatpush1.msra.mxu0 0.0
  %593 = vmatprep.subr.mxu0 0.0
  %594 = vmatpush1.msra.mxu0 0.0
  %595 = vmatprep.subr.mxu0 0.0
  %596 = vmatpush1.msra.mxu0 0.0
  %597 = vmatprep.subr.mxu0 0.0
  %598 = vmatpush1.msra.mxu0 0.0
  %599 = vmatprep.subr.mxu0 0.0
  %600 = vmatpush1.msra.mxu0 0.0
  %601 = vmatprep.subr.mxu0 0.0
  %602 = vmatpush1.msra.mxu0 0.0
  %603 = vmatprep.subr.mxu0 0.0
  %604 = vmatpush1.msra.mxu0 0.0
  %605 = vmatprep.subr.mxu0 0.0
  %606 = vmatpush1.msra.mxu0 0.0
  %607 = vmatprep.subr.mxu0 0.0
  %608 = vmatpush1.msra.mxu0 0.0
  %609 = vmatprep.subr.mxu0 0.0
  %610 = vmatpush1.msra.mxu0 0.0
  %611 = vmatprep.subr.mxu0 0.0
  %612 = vmatpush1.msra.mxu0 0.0
  %613 = vmatprep.subr.mxu0 0.0
  %614 = vmatpush1.msra.mxu0 0.0
  %615 = vmatprep.subr.mxu0 0.0
  %616 = vmatpush1.msra.mxu0 0.0
  %617 = vmatprep.subr.mxu0 0.0
  %618 = vmatpush1.msra.mxu0 0.0
  %619 = vmatprep.subr.mxu0 0.0
  %620 = vmatpush1.msra.mxu0 0.0
  %621 = vmatprep.subr.mxu0 0.0
  %622 = vmatpush1.msra.mxu0 0.0
  %623 = vmatprep.mubr.f32.mxu0 0.0
  %624 = vmatmul.mubr.f32.gmra.mrb[0].mxu0 %v228
  %v625 = vpop.f32.mrb[0].mxu0
  %v626 = vadd.f32 %v224, %v625
  %v627 = vpop.f32.mrb[0].mxu0
  %v628 = vadd.f32 %v224, %v627
  %629 = vdwg.mxu0
  %v630 = vadd.f32 %v626, %v628
  %631 = vadd.xlane.f32.xlu0 %v630
  %v632 = vpop.xlane.xlu0 %631
  %v633 = vmul.f32 %v632, %v304
  %v634 = vsub.f32 %v626, %v633
  %v635 = vsub.f32 %v628, %v633
  %v636 = vmul.f32 %v634, %v634
  %v637 = vmul.f32 %v635, %v635
  %v638 = vadd.f32 %v636, %v637
  %639 = vadd.xlane.f32.xlu0 %v638
  %v640 = vpop.xlane.xlu0 %639
  %v641 = vmul.f32 %v640, %v304
  %v642 = vadd.f32 %v641, 1e-05
  %v643 = vrsqrt.pop %v642
  %v644 = vmul.f32 %v634, %v643
  %v645 = vmul.f32 %v635, %v643
  %v646 = vmax.f32 %v644, 0.0
  %v647 = vmax.f32 %v645, 0.0
  %648 = vrot.lane.b32.xlu0 %v646, 17
  %v649 = vpop.permute.xlu0 %648
  %650 = vrot.lane.b32.xlu0 %v647, 17
  %v651 = vpop.permute.xlu0 %650
  %v652 = vsel %vm52, %v649, %v651
  %v653 = vsel %vm52, %v651, %v649
  %v654 = vmul.f32 %v653, %v59
  %v655 = vmul.f32 %v652, %v63
  %656 = vrot.lane.b32.xlu0 %v646, 16
  %v657 = vpop.permute.xlu0 %656
  %658 = vrot.lane.b32.xlu0 %v647, 16
  %v659 = vpop.permute.xlu0 %658
  %v660 = vsel %vm72, %v657, %v659
  %v661 = vsel %vm72, %v659, %v657
  %v662 = vmul.f32 %v661, %v79
  %v663 = vmul.f32 %v660, %v83
  %664 = vrot.lane.b32.xlu0 %v646, 15
  %v665 = vpop.permute.xlu0 %664
  %666 = vrot.lane.b32.xlu0 %v647, 15
  %v667 = vpop.permute.xlu0 %666
  %v668 = vsel %vm92, %v665, %v667
  %v669 = vsel %vm92, %v667, %v665
  %v670 = vmul.f32 %v669, %v99
  %v671 = vmul.f32 %v668, %v103
  %672 = vrot.lane.b32.xlu0 %v646, 1
  %v673 = vpop.permute.xlu0 %672
  %674 = vrot.lane.b32.xlu0 %v647, 1
  %v675 = vpop.permute.xlu0 %674
  %v676 = vsel %vm112, %v673, %v675
  %v677 = vsel %vm112, %v675, %v673
  %v678 = vmul.f32 %v677, %v119
  %v679 = vmul.f32 %v676, %v123
  %v680 = vmul.f32 %v646, %v132
  %v681 = vmul.f32 %v647, %v136
  %682 = vrot.lane.b32.xlu0 %v646, 127
  %v683 = vpop.permute.xlu0 %682
  %684 = vrot.lane.b32.xlu0 %v647, 127
  %v685 = vpop.permute.xlu0 %684
  %v686 = vsel %vm145, %v683, %v685
  %v687 = vsel %vm145, %v685, %v683
  %v688 = vmul.f32 %v686, %v152
  %v689 = vmul.f32 %v687, %v156
  %690 = vrot.lane.b32.xlu0 %v646, 113
  %v691 = vpop.permute.xlu0 %690
  %692 = vrot.lane.b32.xlu0 %v647, 113
  %v693 = vpop.permute.xlu0 %692
  %v694 = vsel %vm165, %v691, %v693
  %v695 = vsel %vm165, %v693, %v691
  %v696 = vmul.f32 %v694, %v172
  %v697 = vmul.f32 %v695, %v176
  %698 = vrot.lane.b32.xlu0 %v646, 112
  %v699 = vpop.permute.xlu0 %698
  %700 = vrot.lane.b32.xlu0 %v647, 112
  %v701 = vpop.permute.xlu0 %700
  %v702 = vsel %vm185, %v699, %v701
  %v703 = vsel %vm185, %v701, %v699
  %v704 = vmul.f32 %v702, %v192
  %v705 = vmul.f32 %v703, %v196
  %706 = vrot.lane.b32.xlu0 %v646, 111
  %v707 = vpop.permute.xlu0 %706
  %708 = vrot.lane.b32.xlu0 %v647, 111
  %v709 = vpop.permute.xlu0 %708
  %v710 = vsel %vm205, %v707, %v709
  %v711 = vsel %vm205, %v709, %v707
  %v712 = vmul.f32 %v710, %v212
  %v713 = vmul.f32 %v711, %v216
  %714 = vmatprep.subr.mxu0 %v655
  %715 = vmatpush1.msra.mxu0 %v654
  %716 = vmatprep.subr.mxu0 %v663
  %717 = vmatpush1.msra.mxu0 %v662
  %718 = vmatprep.subr.mxu0 %v671
  %719 = vmatpush1.msra.mxu0 %v670
  %720 = vmatprep.subr.mxu0 %v679
  %721 = vmatpush1.msra.mxu0 %v678
  %722 = vmatprep.subr.mxu0 %v681
  %723 = vmatpush1.msra.mxu0 %v680
  %724 = vmatprep.subr.mxu0 %v689
  %725 = vmatpush1.msra.mxu0 %v688
  %726 = vmatprep.subr.mxu0 %v697
  %727 = vmatpush1.msra.mxu0 %v696
  %728 = vmatprep.subr.mxu0 %v705
  %729 = vmatpush1.msra.mxu0 %v704
  %730 = vmatprep.subr.mxu0 %v713
  %731 = vmatpush1.msra.mxu0 %v712
  %732 = vmatprep.subr.mxu0 0.0
  %733 = vmatpush1.msra.mxu0 0.0
  %734 = vmatprep.subr.mxu0 0.0
  %735 = vmatpush1.msra.mxu0 0.0
  %736 = vmatprep.subr.mxu0 0.0
  %737 = vmatpush1.msra.mxu0 0.0
  %738 = vmatprep.subr.mxu0 0.0
  %739 = vmatpush1.msra.mxu0 0.0
  %740 = vmatprep.subr.mxu0 0.0
  %741 = vmatpush1.msra.mxu0 0.0
  %742 = vmatprep.subr.mxu0 0.0
  %743 = vmatpush1.msra.mxu0 0.0
  %744 = vmatprep.subr.mxu0 0.0
  %745 = vmatpush1.msra.mxu0 0.0
  %746 = vmatprep.subr.mxu0 0.0
  %747 = vmatpush1.msra.mxu0 0.0
  %748 = vmatprep.subr.mxu0 0.0
  %749 = vmatpush1.msra.mxu0 0.0
  %750 = vmatprep.subr.mxu0 0.0
  %751 = vmatpush1.msra.mxu0 0.0
  %752 = vmatprep.subr.mxu0 0.0
  %753 = vmatpush1.msra.mxu0 0.0
  %754 = vmatprep.subr.mxu0 0.0
  %755 = vmatpush1.msra.mxu0 0.0
  %756 = vmatprep.subr.mxu0 0.0
  %757 = vmatpush1.msra.mxu0 0.0
  %758 = vmatprep.subr.mxu0 0.0
  %759 = vmatpush1.msra.mxu0 0.0
  %760 = vmatprep.subr.mxu0 0.0
  %761 = vmatpush1.msra.mxu0 0.0
  %762 = vmatprep.subr.mxu0 0.0
  %763 = vmatpush1.msra.mxu0 0.0
  %764 = vmatprep.subr.mxu0 0.0
  %765 = vmatpush1.msra.mxu0 0.0
  %766 = vmatprep.subr.mxu0 0.0
  %767 = vmatpush1.msra.mxu0 0.0
  %768 = vmatprep.subr.mxu0 0.0
  %769 = vmatpush1.msra.mxu0 0.0
  %770 = vmatprep.subr.mxu0 0.0
  %771 = vmatpush1.msra.mxu0 0.0
  %772 = vmatprep.subr.mxu0 0.0
  %773 = vmatpush1.msra.mxu0 0.0
  %774 = vmatprep.subr.mxu0 0.0
  %775 = vmatpush1.msra.mxu0 0.0
  %776 = vmatprep.subr.mxu0 0.0
  %777 = vmatpush1.msra.mxu0 0.0
  %778 = vmatprep.mubr.f32.mxu0 0.0
  %779 = vmatmul.mubr.f32.gmra.mrb[0].mxu0 %v392
  %v780 = vpop.f32.mrb[0].mxu0
  %v781 = vadd.f32 %v389, %v780
  %v782 = vpop.f32.mrb[0].mxu0
  %v783 = vadd.f32 %v389, %v782
  %784 = vdwg.mxu0
  %v785 = vadd.f32 %v781, %v783
  %786 = vadd.xlane.f32.xlu0 %v785
  %v787 = vpop.xlane.xlu0 %786
  %v788 = vmul.f32 %v787, %v304
  %v789 = vsub.f32 %v781, %v788
  %v790 = vsub.f32 %v783, %v788
  %v791 = vmul.f32 %v789, %v789
  %v792 = vmul.f32 %v790, %v790
  %v793 = vadd.f32 %v791, %v792
  %794 = vadd.xlane.f32.xlu0 %v793
  %v795 = vpop.xlane.xlu0 %794
  %v796 = vmul.f32 %v795, %v304
  %v797 = vadd.f32 %v796, 1e-05
  %v798 = vrsqrt.pop %v797
  %v799 = vmul.f32 %v789, %v798
  %v800 = vmul.f32 %v790, %v798
  %v801 = vadd.f32 %v799, %v491
  %v802 = vadd.f32 %v800, %v492
  %v803 = vmax.f32 %v801, 0.0
  %v804 = vmax.f32 %v802, 0.0
  %v807 = vcombine.low %v803, %v804
  %s809 = scalar_lea.vmem %s6, 8
  %810 = vst [vmem:[%s809] sm:$0xff] %v807
  // Predicated region
  $region26: #{resnet_block.1} parent=0 // pred_check
    _
  $region27: #{resnet_block.1} parent=0 // pred_check_branch
    %812 = sbr.rel (0) target = $region29
  $region28: #{resnet_block.1} parent=0 // pred_region
    _
  $region29: #{resnet_block.1} parent=0 // pred_fallthru
    _
  // Predicated region
  $region30: #{resnet_block.1} parent=0 // pred_check
    _
  $region31: #{resnet_block.1} parent=0 // pred_check_branch
    %814 = sbr.rel (0) target = $region33
  $region32: #{resnet_block.1} parent=0 // pred_region
    _
  $region33: #{resnet_block.1} parent=0 // pred_fallthru
    _

</llo_original>
